<compile_context>
chip_gen: v5e
topology: v5e:2x2
jax: 0.10.0
libtpu: 0.0.40
codegen_flags: <defaults>
</compile_context>

<pallas_src>
import jax
import jax.numpy as jnp
import numpy as np
from jax.experimental import pallas as pl
from jax.experimental.pallas import tpu as pltpu

NEG_SLOPE = 0.01   # nn.LeakyReLU() default negative_slope
BN_EPS = 1e-5      # nn.BatchNorm2d default eps


def _convt_lrelu_stats_kernel(xcol_ref, w_ref, b_ref, y_ref, stats_ref):
    """One im2col matmul + bias + LeakyReLU + per-block batch statistics.

    xcol_ref  : (1, 9*C, B*H*W)  im2col block (pixels of B batch elements on the lane axis)
    w_ref     : (4*OC, 9*C)      packed transposed-conv weights (4 sub-pixels stacked on rows)
    b_ref     : (4*OC, 1)        conv bias replicated across the 4 sub-pixels
    y_ref     : (1, 4*OC, B*H*W) lane-dense conv + LeakyReLU output
    stats_ref : (1, 2, 4*OC)     per-block [sum, sum-of-squares] over pixels (for BatchNorm)
    """
    xcol = xcol_ref[0]                                      # (9*C, B*H*W)

    # Single MXU pass: (4*OC, 9*C) x (9*C, B*H*W) -> (4*OC, B*H*W), accumulator lane-dense.
    acc = jax.lax.dot_general(
        w_ref[...], xcol,
        dimension_numbers=(((1,), (0,)), ((), ())),
        preferred_element_type=jnp.float32)

    acc = acc + b_ref[...]                                  # (4*OC, 1) broadcast over lanes
    acc = jnp.maximum(acc, NEG_SLOPE * acc)                 # LeakyReLU (2 VALU ops)

    # Per-block partial BN statistics; reduced across blocks in the wrapper -> grid stays
    # "parallel" (no cross-step accumulator, usable by v7x's 2 TensorCores).
    s = jnp.sum(acc, axis=1)                                # (4*OC,)
    sq = jnp.sum(acc * acc, axis=1)
    stats_ref[0] = jnp.stack([s, sq], axis=0)               # (2, 4*OC)

    y_ref[0] = acc                                          # dense store, no transpose


def _pick_batch_block(N, C, OC, H, W):
    """Batch elements per grid step: amortize step overhead, keep >= 2 steps when N >= 2."""
    if N <= 1:
        return 1
    per_elem = (9 * C + 4 * OC) * H * W * 4 * 2             # in+out, double-buffered, f32
    cap = max(1, (8 * 1024 * 1024) // per_elem)             # ~8 MiB budget for the blocks
    b = min(N // 2, cap)                                    # >= 2 grid steps for v7x megacore
    b = max(b, 1)
    while N % b != 0:                                       # keep the grid exact
        b -= 1
    return b


@jax.jit
def upsample_block_forward(x_nchw, weight, bias, gamma, beta):
    """Forward pass of UpsampleBlock.  x_nchw: (N, C, H, W) -> (N, OC, 2H, 2W)."""
    N, C, H, W = x_nchw.shape
    OC = weight.shape[1]
    P = 4 * OC                                              # 4 sub-pixels x output channels
    K = 9 * C                                               # 3x3 taps x input channels
    HW = H * W

    B = _pick_batch_block(N, C, OC, H, W)
    G = N // B

    # ---- im2col in the wrapper (plain XLA; C is small so the ~9x replication is cheap) ----
    x = x_nchw.astype(jnp.float32)
    xp = jnp.pad(x, ((0, 0), (0, 0), (1, 1), (1, 1)))       # NCHW zero-pad spatial by 1
    taps = [xp[:, :, dy:dy + H, dx:dx + W]                  # each (N, C, H, W)
            for dy in range(3) for dx in range(3)]
    xcol = jnp.stack(taps, axis=1).reshape(N, K, HW)        # K index = (dy*3+dx)*C + c
    # Batch-block: concatenate B elements on the lane axis -> (G, 9*C, B*H*W)
    xcol = xcol.reshape(G, B, K, HW).transpose(0, 2, 1, 3).reshape(G, K, B * HW)

    # ---- pack ConvTranspose2d weight (C, OC, 4, 4) into one (4*OC, 9*C) matrix ----
    # Sub-pixel (r, s) of the stride-2 output is a 2x2 "forward" conv over the padded input;
    # tap (dy, dx) contributes to sub-pixel (r, s) iff dy-r, dx-s in {0,1}, with kernel element
    # wt[ktab[r][dy-r], ktab[s][dx-s]]  (ktab = [[3,1],[2,0]]).  Zeros elsewhere.
    wt = jnp.transpose(weight, (2, 3, 0, 1)).astype(jnp.float32)   # (ky, kx, C, OC)
    ktab = [[3, 1], [2, 0]]
    w_packed = jnp.zeros((P, K), jnp.float32)
    for r in range(2):
        for s in range(2):
            for dy in range(3):
                for dx in range(3):
                    dyp, dxp = dy - r, dx - s
                    if 0 <= dyp <= 1 and 0 <= dxp <= 1:
                        blk = wt[ktab[r][dyp], ktab[s][dxp]].T     # (OC, C)
                        w_packed = w_packed.at[
                            (r * 2 + s) * OC:(r * 2 + s + 1) * OC,
                            (dy * 3 + dx) * C:(dy * 3 + dx + 1) * C].set(blk)
    bias_packed = jnp.tile(bias.astype(jnp.float32), 4).reshape(P, 1)

    y, stats = pl.pallas_call(
        _convt_lrelu_stats_kernel,
        out_shape=(
            jax.ShapeDtypeStruct((G, P, B * HW), jnp.float32),   # conv + LeakyReLU (lane-dense)
            jax.ShapeDtypeStruct((G, 2, P), jnp.float32),        # per-block [sum, sum-of-sq]
        ),
        grid=(G,),
        in_specs=[
            pl.BlockSpec((1, K, B * HW), lambda g: (g, 0, 0)),
            pl.BlockSpec((P, K), lambda g: (0, 0)),
            pl.BlockSpec((P, 1), lambda g: (0, 0)),
        ],
        out_specs=(
            pl.BlockSpec((1, P, B * HW), lambda g: (g, 0, 0)),
            pl.BlockSpec((1, 2, P), lambda g: (g, 0, 0)),
        ),
        compiler_params=pltpu.CompilerParams(
            dimension_semantics=("parallel",),       # per-block stats: no cross-step carry
            vmem_limit_bytes=32 * 1024 * 1024,       # safe on v7x (64 MiB) as well as v5e/v6e
        ),
    )(xcol, w_packed, bias_packed)

    # ---- BatchNorm2d (training mode): batch statistics over (N, 2H, 2W), biased variance ----
    count = jnp.float32(N * 4 * HW)                          # = N * (2H) * (2W)
    ch = stats.sum(axis=0)                                   # (2, 4*OC)
    ch_sum = ch[0].reshape(4, OC).sum(axis=0)                # (OC,)
    ch_sq = ch[1].reshape(4, OC).sum(axis=0)
    mean = ch_sum / count
    var = ch_sq / count - mean * mean                        # biased variance (f32 sum-of-sq)
    scale = gamma.astype(jnp.float32) / jnp.sqrt(var + BN_EPS)
    shift = beta.astype(jnp.float32) - mean * scale

    # ---- affine + un-block batch + depth-to-space + NCHW: one fused XLA epilogue pass ----
    scale4 = jnp.tile(scale, 4)                              # matches p*OC+oc row packing
    shift4 = jnp.tile(shift, 4)
    z = y * scale4[None, :, None] + shift4[None, :, None]    # (G, 4*OC, B*H*W)
    z = z.reshape(G, P, B, HW).transpose(0, 2, 1, 3).reshape(N, P, HW)
    z = z.reshape(N, 2, 2, OC, H, W)                         # (n, r, s, oc, i, j)
    z = jnp.transpose(z, (0, 3, 4, 1, 5, 2))                 # (n, oc, i, r, j, s)
    return z.reshape(N, OC, 2 * H, 2 * W)                    # out[n, oc, 2i+r, 2j+s]


def _reference(x, weight, bias, gamma, beta):
    """Pure-JAX reference reproducing PyTorch semantics (NCHW)."""
    w_flip = jnp.transpose(weight[:, :, ::-1, ::-1], (1, 0, 2, 3))     # (OC, C, 4, 4)
    y = jax.lax.conv_general_dilated(
        x, w_flip, window_strides=(1, 1), padding=((2, 2), (2, 2)),
        lhs_dilation=(2, 2), dimension_numbers=("NCHW", "OIHW", "NCHW"))
    y = y + bias[None, :, None, None]
    y = jnp.where(y >= 0, y, NEG_SLOPE * y)
    mean = jnp.mean(y, axis=(0, 2, 3), keepdims=True)
    var = jnp.mean((y - mean) ** 2, axis=(0, 2, 3), keepdims=True)
    return (y - mean) / jnp.sqrt(var + BN_EPS) * gamma[None, :, None, None] \
        + beta[None, :, None, None]


if __name__ == "__main__":
    key = jax.random.PRNGKey(0)
    k1, k2, k3, k4, k5 = jax.random.split(key, 5)

    N, C, OC, H, W = 2, 4, 8, 16, 16
    x = jax.random.normal(k1, (N, C, H, W), jnp.float32)
    # ConvTranspose2d(input_c=C, out_c=OC, kernel=4): weight (C, OC, 4, 4), bias (OC,)
    weight = jax.random.normal(k2, (C, OC, 4, 4), jnp.float32) / jnp.sqrt(C * 16.0)
    bias = 0.1 * jax.random.normal(k3, (OC,), jnp.float32)
    # BatchNorm2d(OC) affine params (perturbed from the 1/0 defaults deterministically)
    gamma = 1.0 + 0.1 * jax.random.normal(k4, (OC,), jnp.float32)
    beta = 0.1 * jax.random.normal(k5, (OC,), jnp.float32)

    out = upsample_block_forward(x, weight, bias, gamma, beta)
    out = jax.block_until_ready(out)
    assert out.shape == (N, OC, 2 * H, 2 * W)

    ref = _reference(x, weight, bias, gamma, beta)
    np.testing.assert_allclose(np.asarray(out), np.asarray(ref), atol=1e-4, rtol=1e-4)
    print("KERNEL_OK")
</pallas_src>

<mosaic_0001>
module attributes {stable_mosaic.version = 11 : i64} {
  func.func @_convt_lrelu_stats_kernel(%arg0: i32, %arg1: memref<1x36x256xf32, #tpu.memory_space<vmem>>, %arg2: memref<32x36xf32, #tpu.memory_space<vmem>>, %arg3: memref<32x1xf32, #tpu.memory_space<vmem>>, %arg4: memref<1x32x256xf32, #tpu.memory_space<vmem>>, %arg5: memref<1x2x32xf32, #tpu.memory_space<vmem>>) attributes {dimension_semantics = [#tpu.dimension_semantics<parallel>], iteration_bounds = array<i64: 2>, scalar_prefetch = 0 : i64, scratch_operands = 0 : i64, tpu.core_type = #tpu.core_type<tc>, window_params = [{transform_indices = @transform_0, window_bounds = array<i64: 1, 36, 256>}, {pipeline_mode = #tpu.pipeline_mode<synchronous>, transform_indices = @transform_1, window_bounds = array<i64: 32, 36>}, {pipeline_mode = #tpu.pipeline_mode<synchronous>, transform_indices = @transform_2, window_bounds = array<i64: 32, 1>}, {transform_indices = @transform_3, window_bounds = array<i64: 1, 32, 256>}, {transform_indices = @transform_4, window_bounds = array<i64: 1, 2, 32>}]} {
    %c0 = arith.constant 0 : index
    %c0_0 = arith.constant 0 : index
    %c0_1 = arith.constant 0 : index
    %0 = vector.load %arg1[%c0, %c0_0, %c0_1] : memref<1x36x256xf32, #tpu.memory_space<vmem>>, vector<1x36x256xf32>
    %1 = vector.shape_cast %0 : vector<1x36x256xf32> to vector<36x256xf32>
    %c0_2 = arith.constant 0 : index
    %c0_3 = arith.constant 0 : index
    %2 = vector.load %arg2[%c0_2, %c0_3] : memref<32x36xf32, #tpu.memory_space<vmem>>, vector<32x36xf32>
    %cst = arith.constant dense<0.000000e+00> : vector<32x256xf32>
    %3 = tpu.matmul %2, %1, %cst {dimension_numbers = #tpu.dot_dimension_numbers<[1], [0], [0], [1], [0, 0, 1, 1], [], []>} : vector<32x36xf32>, vector<36x256xf32>, vector<32x256xf32> -> vector<32x256xf32>
    %c0_4 = arith.constant 0 : index
    %c0_5 = arith.constant 0 : index
    %4 = vector.load %arg3[%c0_4, %c0_5] : memref<32x1xf32, #tpu.memory_space<vmem>>, vector<32x1xf32>
    %5 = vector.broadcast %4 : vector<32x1xf32> to vector<32x256xf32>
    %6 = arith.addf %3, %5 : vector<32x256xf32>
    %cst_6 = arith.constant 0.00999999977 : f32
    %7 = vector.broadcast %cst_6 : f32 to vector<32x256xf32>
    %8 = arith.mulf %7, %6 : vector<32x256xf32>
    %9 = arith.maximumf %6, %8 : vector<32x256xf32>
    %cst_7 = arith.constant dense<0.000000e+00> : vector<32xf32>
    %10 = vector.multi_reduction <add>, %9, %cst_7 [1] : vector<32x256xf32> to vector<32xf32>
    %11 = arith.mulf %9, %9 : vector<32x256xf32>
    %cst_8 = arith.constant dense<0.000000e+00> : vector<32xf32>
    %12 = vector.multi_reduction <add>, %11, %cst_8 [1] : vector<32x256xf32> to vector<32xf32>
    %13 = vector.shape_cast %10 : vector<32xf32> to vector<1x32xf32>
    %14 = vector.shape_cast %12 : vector<32xf32> to vector<1x32xf32>
    %15 = tpu.concatenate %13, %14 in 0 : vector<1x32xf32>, vector<1x32xf32> -> vector<2x32xf32>
    %c0_9 = arith.constant 0 : index
    %c0_10 = arith.constant 0 : index
    %c0_11 = arith.constant 0 : index
    %16 = vector.load %arg5[%c0_9, %c0_10, %c0_11] : memref<1x2x32xf32, #tpu.memory_space<vmem>>, vector<1x2x32xf32>
    %17 = vector.shape_cast %16 : vector<1x2x32xf32> to vector<2x32xf32>
    %18 = vector.shape_cast %15 : vector<2x32xf32> to vector<1x2x32xf32>
    tpu.vector_store %arg5[%c0_9, %c0_10, %c0_11], %18 {strides = array<i32>} : memref<1x2x32xf32, #tpu.memory_space<vmem>>, vector<1x2x32xf32>,
    %c0_12 = arith.constant 0 : index
    %c0_13 = arith.constant 0 : index
    %c0_14 = arith.constant 0 : index
    %19 = vector.load %arg4[%c0_12, %c0_13, %c0_14] : memref<1x32x256xf32, #tpu.memory_space<vmem>>, vector<1x32x256xf32>
    %20 = vector.shape_cast %19 : vector<1x32x256xf32> to vector<32x256xf32>
    %21 = vector.shape_cast %9 : vector<32x256xf32> to vector<1x32x256xf32>
    tpu.vector_store %arg4[%c0_12, %c0_13, %c0_14], %21 {strides = array<i32>} : memref<1x32x256xf32, #tpu.memory_space<vmem>>, vector<1x32x256xf32>,
    return
  }
  func.func @transform_0(%arg0: i32) -> (i32, i32, i32) {
    %c0_i32 = arith.constant 0 : i32
    %c0_i32_0 = arith.constant 0 : i32
    %c0_i32_1 = arith.constant 0 : i32
    return %arg0, %c0_i32, %c0_i32_0 : i32, i32, i32
  }
  func.func @transform_1(%arg0: i32) -> (i32, i32) {
    %c0_i32 = arith.constant 0 : i32
    %c0_i32_0 = arith.constant 0 : i32
    %c0_i32_1 = arith.constant 0 : i32
    return %c0_i32, %c0_i32_0 : i32, i32
  }
  func.func @transform_2(%arg0: i32) -> (i32, i32) {
    %c0_i32 = arith.constant 0 : i32
    %c0_i32_0 = arith.constant 0 : i32
    %c0_i32_1 = arith.constant 0 : i32
    return %c0_i32, %c0_i32_0 : i32, i32
  }
  func.func @transform_3(%arg0: i32) -> (i32, i32, i32) {
    %c0_i32 = arith.constant 0 : i32
    %c0_i32_0 = arith.constant 0 : i32
    %c0_i32_1 = arith.constant 0 : i32
    return %arg0, %c0_i32, %c0_i32_0 : i32, i32, i32
  }
  func.func @transform_4(%arg0: i32) -> (i32, i32, i32) {
    %c0_i32 = arith.constant 0 : i32
    %c0_i32_0 = arith.constant 0 : i32
    %c0_i32_1 = arith.constant 0 : i32
    return %arg0, %c0_i32, %c0_i32_0 : i32, i32, i32
  }
}

</mosaic_0001>

<llo_original>
// kernel: tile.0
$region0: #{tile.0}
  %s0 = inlined_call_operand.vmem [shape: f32[4,8], index: 0, kind: input, shape index: {}]
  %s1 = inlined_call_operand.vmem [shape: f32[32,1], index: 1, kind: output, shape index: {}]
  $region1: #{tile.0} parent=0
    #allocation0 [shape = 'u8[4096]{0}', space=vmem, size = 0x1000, scoped, tag = 'scoped mem for input reshape']
    %s3 = ssub.s32 16, 1
    %v4 = vld [vmem:[%s0] sm:%s3]
    %5 = vst [vmem:[#allocation0] sm:%s3] %v4
    %v6 = vld [vmem:[#allocation0] sm:$0xf]
    %vm7 = vcmask 7168
    %8 = vst.msk [vmem:[%s1] ss:$8 sm:$0xf] %vm7, %v6
    %v9 = vld [vmem:[#allocation0] sm:$0xf]
    %10 = vrot.lane.b32.xlu0 %v9, 127
    %v11 = vpop.permute.xlu0 %10
    %vm12 = vcmask 7168
    %s13 = scalar_lea.vmem %s1, 1
    %14 = vst.msk [vmem:[%s13] ss:$8 sm:$0xf] %vm12, %v11
    %v15 = vld [vmem:[#allocation0] sm:$0xf]
    %16 = vrot.lane.b32.xlu0 %v15, 126
    %v17 = vpop.permute.xlu0 %16
    %vm18 = vcmask 7168
    %s19 = scalar_lea.vmem %s1, 2
    %20 = vst.msk [vmem:[%s19] ss:$8 sm:$0xf] %vm18, %v17
    %v21 = vld [vmem:[#allocation0] sm:$0xf]
    %22 = vrot.lane.b32.xlu0 %v21, 125
    %v23 = vpop.permute.xlu0 %22
    %vm24 = vcmask 7168
    %s25 = scalar_lea.vmem %s1, 3
    %26 = vst.msk [vmem:[%s25] ss:$8 sm:$0xf] %vm24, %v23
    %v27 = vld [vmem:[#allocation0] sm:$0xf]
    %28 = vrot.lane.b32.xlu0 %v27, 124
    %v29 = vpop.permute.xlu0 %28
    %vm30 = vcmask 7168
    %s31 = scalar_lea.vmem %s1, 4
    %32 = vst.msk [vmem:[%s31] ss:$8 sm:$0xf] %vm30, %v29
    %v33 = vld [vmem:[#allocation0] sm:$0xf]
    %34 = vrot.lane.b32.xlu0 %v33, 123
    %v35 = vpop.permute.xlu0 %34
    %vm36 = vcmask 7168
    %s37 = scalar_lea.vmem %s1, 5
    %38 = vst.msk [vmem:[%s37] ss:$8 sm:$0xf] %vm36, %v35
    %v39 = vld [vmem:[#allocation0] sm:$0xf]
    %40 = vrot.lane.b32.xlu0 %v39, 122
    %v41 = vpop.permute.xlu0 %40
    %vm42 = vcmask 7168
    %s43 = scalar_lea.vmem %s1, 6
    %44 = vst.msk [vmem:[%s43] ss:$8 sm:$0xf] %vm42, %v41
    %v45 = vld [vmem:[#allocation0] sm:$0xf]
    %46 = vrot.lane.b32.xlu0 %v45, 121
    %v47 = vpop.permute.xlu0 %46
    %vm48 = vcmask 7168
    %s49 = scalar_lea.vmem %s1, 7
    %50 = vst.msk [vmem:[%s49] ss:$8 sm:$0xf] %vm48, %v47

// kernel: tile.18
$region0: #{tile.18}
  #allocation0 [shape = 's32[1]{0}', space=sflag, size = 0x4, scoped, tag = 'scoped memory for tile.18']
  %s0 = inlined_call_operand.vmem [shape: f32[8], index: 0, kind: input, shape index: {}]
  %s1 = inlined_call_operand.vmem [shape: f32[4,8], index: 1, kind: output, shape index: {}]
  // Predicated region
  $region2: #{tile.18} parent=0 // pred_check
    _
  $region3: #{tile.18} parent=0 // pred_check_branch
    %3 = sbr.rel (0) target = $region5
  $region4: #{tile.18} parent=0 // pred_region
    _
  $region5: #{tile.18} parent=0 // pred_fallthru
    _
  %v4 = vld [vmem:[%s0] ss:$0 sm:$0xff]
  %5 = vst [vmem:[%s1] sm:$0xf] %v4

// kernel: squeeze.34
$region0: #{squeeze.34}
  %s0 = inlined_call_operand.vmem [shape: f32[32], index: 0, kind: input, shape index: {}]
  %s1 = inlined_call_operand.vmem [shape: f32[4,8], index: 1, kind: output, shape index: {}]
  $region1: #{squeeze.34} parent=0
    #allocation0 [shape = 'u8[4096]{0}', space=vmem, size = 0x1000, scoped, tag = 'scoped mem for output reshape']
    #allocation1 [shape = 'u8[4096]{0}', space=vmem, size = 0x1000, scoped, tag = 'scoped mem for input reshape']
    %s3 = ssub.s32 2, 1
    %v4 = vld [vmem:[%s0] sm:%s3]
    %5 = vst [vmem:[#allocation1] sm:%s3] %v4
    %v6 = vld [vmem:[#allocation1] sm:$0x1]
    %vm7 = vcmask 64512
    %8 = vst.msk [vmem:[#allocation0] sm:$0x1] %vm7, %v6
    %v9 = vld [vmem:[#allocation1] sm:$0x1]
    %10 = vrot.lane.b32.xlu0 %v9, 120
    %v11 = vpop.permute.xlu0 %10
    %vm12 = vcmask 64512
    %s13 = scalar_lea.vmem [#allocation0], 1
    %14 = vst.msk [vmem:[%s13] sm:$0x1] %vm12, %v11
    %v15 = vld [vmem:[#allocation1] sm:$0x1]
    %16 = vrot.lane.b32.xlu0 %v15, 112
    %v17 = vpop.permute.xlu0 %16
    %vm18 = vcmask 64512
    %s19 = scalar_lea.vmem [#allocation0], 2
    %20 = vst.msk [vmem:[%s19] sm:$0x1] %vm18, %v17
    %v21 = vld [vmem:[#allocation1] sm:$0x1]
    %22 = vrot.lane.b32.xlu0 %v21, 104
    %v23 = vpop.permute.xlu0 %22
    %vm24 = vcmask 64512
    %s25 = scalar_lea.vmem [#allocation0], 3
    %26 = vst.msk [vmem:[%s25] sm:$0x1] %vm24, %v23
    %s28 = ssub.s32 16, 1
    %v29 = vld [vmem:[#allocation0] sm:%s28]
    %s31 = ssub.s32 16, 1
    %32 = vst [vmem:[%s1] sm:%s31] %v29

// kernel: upsample_block_forward.1
$region0: #{upsample_block_forward.1}
  #allocation0 [shape = 'u32[]', space=smem, size = 0x4, offset = 0x4, fixed_abs, tag = 'smem constant byte address 0x4 - core index']
  #allocation1 [shape = 'u32[72,128]{1,0:T(1,128)}', space=vmem, size = 0x9000, scoped, tag = 'internal scratch']
  %s0 = inlined_call_operand.vmem [shape: f32[2,36,256], index: 0, kind: input, shape index: {}]
  %s1 = inlined_call_operand.vmem [shape: f32[32,36], index: 1, kind: input, shape index: {}]
  %s2 = inlined_call_operand.vmem [shape: f32[32,1], index: 2, kind: input, shape index: {}]
  %s3 = inlined_call_operand.vmem [shape: f32[2,32,256], index: 3, kind: output, shape index: {0}]
  %s4 = inlined_call_operand.vmem [shape: f32[2,2,32], index: 4, kind: output, shape index: {1}]
  %5 = xla_tuple %s3, %s4
  %s6 = sld [smem:[#allocation0]]
  $region53: #{upsample_block_forward.1} parent=0
    _
  %s8 = ssub.s32 1, %s6
  %s9 = scalar_select 0, %s8, %s6
  loop: start=0, step=1, limit=4
  $region2: #{upsample_block_forward.1} parent=0 // loop_pre_header
    _
  $region3: #{upsample_block_forward.1} parent=0 // loop_header
    %s11 = sphi 0, %s15
    %p12 = scmp.ge.s32.totalorder %s11, 4
    %s21 = sphi 0, %s23
    %s24 = sphi 0, %s21
    %s25 = sphi 0, %s24
    %s41 = sphi 0, %s25
    %s45 = sphi 0, %s45
    %s47 = sphi 0, %s45
    %s48 = sphi 0, %s47
    %s62 = sphi 0, %s48
    %s66 = sphi 0, %s66
    %s68 = sphi 0, %s66
    %s69 = sphi 0, %s68
    %s83 = sphi 0, %s69
    %s89 = sphi 0, %s91
    %s92 = sphi 0, %s89
    %s93 = sphi 0, %s92
    %s109 = sphi 0, %s93
    %s115 = sphi 0, %s117
    %s118 = sphi 0, %s115
    %s119 = sphi 0, %s118
    %s135 = sphi 0, %s119
  $region4: #{upsample_block_forward.1} parent=0 // loop_header_branch
    %14 = sbr.rel (%p12) target = $region8
  $region5: #{upsample_block_forward.1} parent=0 // loop_body
    %s16 = ssub.s32 %s11, 1
    %s17 = ssub.s32 %s11, 2
    %s18 = sadd.s32 %s11, 1
    %s19 = ssub.s32 %s11, %s18
    %p20 = scmp.eq.s32.totalorder %s19, 0
    %s22 = sadd.s32 %s21, 1
    %s23 = scalar_select %p20, %s21, %s22
    %p26 = pneg %p20
    %p27 = scmp.eq.s32.totalorder %s11, 1
    %p28 = por %p26, %p27
    %p29 = scmp.ne.s32.totalorder %s21, %s24
    %p30 = scmp.eq.s32.totalorder %s11, 0
    %p31 = por %p29, %p30
    %p32 = scmp.ne.s32.totalorder %s21, %s24
    %p33 = scmp.eq.s32.totalorder %s16, 1
    %p34 = por %p32, %p33
    %p35 = scmp.ne.s32.totalorder %s24, %s25
    %p36 = scmp.eq.s32.totalorder %s16, 0
    %p37 = por %p35, %p36
    %p38 = scmp.ne.s32.totalorder %s24, %s25
    %p39 = scmp.eq.s32.totalorder %s17, 1
    %p40 = por %p38, %p39
    %p42 = scmp.ne.s32.totalorder %s25, %s41
    %p43 = scmp.eq.s32.totalorder %s17, 0
    %p44 = por %p42, %p43
    %s46 = sadd.s32 %s45, 1
    %p49 = scmp.eq.s32.totalorder %s11, 1
    %p50 = scmp.ne.s32.totalorder %s45, %s47
    %p51 = scmp.eq.s32.totalorder %s11, 0
    %p52 = por %p50, %p51
    %p53 = scmp.ne.s32.totalorder %s45, %s47
    %p54 = scmp.eq.s32.totalorder %s16, 1
    %p55 = por %p53, %p54
    %p56 = scmp.ne.s32.totalorder %s47, %s48
    %p57 = scmp.eq.s32.totalorder %s16, 0
    %p58 = por %p56, %p57
    %p59 = scmp.ne.s32.totalorder %s47, %s48
    %p60 = scmp.eq.s32.totalorder %s17, 1
    %p61 = por %p59, %p60
    %p63 = scmp.ne.s32.totalorder %s48, %s62
    %p64 = scmp.eq.s32.totalorder %s17, 0
    %p65 = por %p63, %p64
    %s67 = sadd.s32 %s66, 1
    %p70 = scmp.eq.s32.totalorder %s11, 1
    %p71 = scmp.ne.s32.totalorder %s66, %s68
    %p72 = scmp.eq.s32.totalorder %s11, 0
    %p73 = por %p71, %p72
    %p74 = scmp.ne.s32.totalorder %s66, %s68
    %p75 = scmp.eq.s32.totalorder %s16, 1
    %p76 = por %p74, %p75
    %p77 = scmp.ne.s32.totalorder %s68, %s69
    %p78 = scmp.eq.s32.totalorder %s16, 0
    %p79 = por %p77, %p78
    %p80 = scmp.ne.s32.totalorder %s68, %s69
    %p81 = scmp.eq.s32.totalorder %s17, 1
    %p82 = por %p80, %p81
    %p84 = scmp.ne.s32.totalorder %s69, %s83
    %p85 = scmp.eq.s32.totalorder %s17, 0
    %p86 = por %p84, %p85
    %s87 = ssub.s32 %s11, %s18
    %p88 = scmp.eq.s32.totalorder %s87, 0
    %s90 = sadd.s32 %s89, 1
    %s91 = scalar_select %p88, %s89, %s90
    %p94 = pneg %p88
    %p95 = scmp.eq.s32.totalorder %s11, 1
    %p96 = por %p94, %p95
    %p97 = scmp.ne.s32.totalorder %s89, %s92
    %p98 = scmp.eq.s32.totalorder %s11, 0
    %p99 = por %p97, %p98
    %p100 = scmp.ne.s32.totalorder %s89, %s92
    %p101 = scmp.eq.s32.totalorder %s16, 1
    %p102 = por %p100, %p101
    %p103 = scmp.ne.s32.totalorder %s92, %s93
    %p104 = scmp.eq.s32.totalorder %s16, 0
    %p105 = por %p103, %p104
    %p106 = scmp.ne.s32.totalorder %s92, %s93
    %p107 = scmp.eq.s32.totalorder %s17, 1
    %p108 = por %p106, %p107
    %p110 = scmp.ne.s32.totalorder %s93, %s109
    %p111 = scmp.eq.s32.totalorder %s17, 0
    %p112 = por %p110, %p111
    %s113 = ssub.s32 %s11, %s18
    %p114 = scmp.eq.s32.totalorder %s113, 0
    %s116 = sadd.s32 %s115, 1
    %s117 = scalar_select %p114, %s115, %s116
    %p120 = pneg %p114
    %p121 = scmp.eq.s32.totalorder %s11, 1
    %p122 = por %p120, %p121
    %p123 = scmp.ne.s32.totalorder %s115, %s118
    %p124 = scmp.eq.s32.totalorder %s11, 0
    %p125 = por %p123, %p124
    %p126 = scmp.ne.s32.totalorder %s115, %s118
    %p127 = scmp.eq.s32.totalorder %s16, 1
    %p128 = por %p126, %p127
    %p129 = scmp.ne.s32.totalorder %s118, %s119
    %p130 = scmp.eq.s32.totalorder %s16, 0
    %p131 = por %p129, %p130
    %p132 = scmp.ne.s32.totalorder %s118, %s119
    %p133 = scmp.eq.s32.totalorder %s17, 1
    %p134 = por %p132, %p133
    %p136 = scmp.ne.s32.totalorder %s119, %s135
    %p137 = scmp.eq.s32.totalorder %s17, 0
    %p138 = por %p136, %p137
    %p139 = scmp.le.s32.totalorder 1, %s11
    %p140 = scmp.lt.s32.totalorder %s11, 3
    %p141 = pnand %p139, %p140
    %p142 = pneg %p141
    // Predicated region
    $region9: #{upsample_block_forward.1} parent=5 // pred_check
      _
    $region10: #{upsample_block_forward.1} parent=5 // pred_check_branch
      %144 = sbr.rel (%p141) target = $region12
    $region11: #{upsample_block_forward.1} parent=5 // pred_region
      %s145 = ssub.s32 %s11, 1
      // Predicated region
      $region13: #{upsample_block_forward.1} parent=11 // pred_check
        %p146 = pneg %p58
      $region14: #{upsample_block_forward.1} parent=11 // pred_check_branch
        %148 = sbr.rel (%p146) target = $region16
      $region15: #{upsample_block_forward.1} parent=11 // pred_region
        _
      $region16: #{upsample_block_forward.1} parent=11 // pred_fallthru
        _
      // Predicated region
      $region17: #{upsample_block_forward.1} parent=11 // pred_check
        %p149 = pneg %p79
      $region18: #{upsample_block_forward.1} parent=11 // pred_check_branch
        %151 = sbr.rel (%p149) target = $region20
      $region19: #{upsample_block_forward.1} parent=11 // pred_region
        _
      $region20: #{upsample_block_forward.1} parent=11 // pred_fallthru
        _
    $region12: #{upsample_block_forward.1} parent=5 // pred_fallthru
      _
    %p152 = scmp.lt.s32.totalorder %s11, 2
    // Predicated region
    $region21: #{upsample_block_forward.1} parent=5 // pred_check
      %p153 = pneg %p152
    $region22: #{upsample_block_forward.1} parent=5 // pred_check_branch
      %155 = sbr.rel (%p153) target = $region24
    $region23: #{upsample_block_forward.1} parent=5 // pred_region
      // Predicated region
      $region25: #{upsample_block_forward.1} parent=23 // pred_check
        %p156 = pneg %p31
      $region26: #{upsample_block_forward.1} parent=23 // pred_check_branch
        %158 = sbr.rel (%p156) target = $region28
      $region27: #{upsample_block_forward.1} parent=23 // pred_region
        %p159 = scmp.lt.s32.totalorder %s11, 1
        %s160 = scalar_select %p159, %s11, 1
        %s161 = smul.addr %s160, 10
        %s162 = smul.addr %s161, 8
        %s163 = scalar_lea.vmem %s0, %s162
      $region28: #{upsample_block_forward.1} parent=23 // pred_fallthru
        _
    $region24: #{upsample_block_forward.1} parent=5 // pred_fallthru
      _
    %p164 = scmp.le.s32.totalorder 1, %s11
    %p165 = scmp.lt.s32.totalorder %s11, 3
    %p166 = pnand %p164, %p165
    %p167 = pneg %p166
    // Predicated region
    $region29: #{upsample_block_forward.1} parent=5 // pred_check
      _
    $region30: #{upsample_block_forward.1} parent=5 // pred_check_branch
      %169 = sbr.rel (%p166) target = $region32
    $region31: #{upsample_block_forward.1} parent=5 // pred_region
      %s170 = ssub.s32 %s11, 1
      %p171 = scmp.lt.s32.totalorder %s16, 1
      %s172 = scalar_select %p171, %s16, 1
      %s173 = smul.addr %s172, 10
      %s174 = smul.addr %s173, 8
      %s175 = scalar_lea.vmem %s0, %s174
      %p176 = pneg %p37
      %p177 = pneg %p34
      %p178 = pneg %p58
      %p179 = pneg %p55
      %p180 = pneg %p79
      %p181 = pneg %p76
      %p182 = pneg %p105
      %p183 = pneg %p102
      %p184 = scmp.lt.s32.totalorder %s16, 1
      %s185 = scalar_select %p184, %s16, 1
      %s186 = smul.addr %s185, 8
      %s187 = smul.addr %s186, 8
      %s188 = scalar_lea.vmem %s3, %s187
      %p189 = pneg %p131
      %p190 = pneg %p128
      %p191 = scmp.lt.s32.totalorder %s16, 1
      %s192 = scalar_select %p191, %s16, 1
      %s193 = smul.addr %s192, 2
      %s194 = scalar_lea.vmem %s4, %s193
      %p195 = scmp.lt.s32.totalorder %s16, 1
      %s196 = scalar_select %p195, %s16, 1
      %s197 = smul.addr %s196, 10
      %s198 = smul.addr %s197, 8
      %s199 = scalar_lea.vmem %s0, %s198
      %p200 = scmp.lt.s32.totalorder %s16, 1
      %s201 = scalar_select %p200, %s16, 1
      %s202 = smul.addr %s201, 8
      %s203 = smul.addr %s202, 8
      %s204 = scalar_lea.vmem %s3, %s203
      %p205 = scmp.lt.s32.totalorder %s16, 1
      %s206 = scalar_select %p205, %s16, 1
      %s207 = smul.addr %s206, 2
      %s208 = scalar_lea.vmem %s4, %s207
      %v209 = vld [vmem:[%s199] sm:$0xff]
      %v210 = vld [vmem:[%s199 + $0x8] sm:$0xff]
      %v211 = vld [vmem:[%s199 + $0x10] sm:$0xff]
      %v212 = vld [vmem:[%s199 + $0x18] sm:$0xff]
      %v213 = vld [vmem:[%s199 + $0x20] sm:$0xff]
      %v214 = vld [vmem:[%s199 + $0x28] sm:$0xff]
      %v215 = vld [vmem:[%s199 + $0x30] sm:$0xff]
      %v216 = vld [vmem:[%s199 + $0x38] sm:$0xff]
      %v217 = vld [vmem:[%s199 + $0x40] sm:$0xf]
      %v218 = vld [vmem:[%s199 + $0x48] sm:$0xf]
      %v219 = vld [vmem:[%s1] sm:$0xff]
      %v220 = vld [vmem:[%s1 + $0x8] sm:$0xff]
      %v221 = vld [vmem:[%s1 + $0x10] sm:$0xff]
      %v222 = vld [vmem:[%s1 + $0x18] sm:$0xff]
      %v223 = vld [vmem:[%s2] sm:$0xff]
      %v224 = vld [vmem:[%s2 + $0x8] sm:$0xff]
      %v225 = vld [vmem:[%s2 + $0x10] sm:$0xff]
      %v226 = vld [vmem:[%s2 + $0x18] sm:$0xff]
      %228 = vset.pattern.permute.xlu0 0
      %229 = vperm.xlu0 %228, %v223
      %v230 = vpop.permute.xlu0 %229
      %233 = vset.pattern.permute.xlu0 0
      %234 = vperm.xlu0 %233, %v224
      %v235 = vpop.permute.xlu0 %234
      %238 = vset.pattern.permute.xlu0 0
      %239 = vperm.xlu0 %238, %v225
      %v240 = vpop.permute.xlu0 %239
      %243 = vset.pattern.permute.xlu0 0
      %244 = vperm.xlu0 %243, %v226
      %v245 = vpop.permute.xlu0 %244
      %vm247 = vcmask 293888
      %v249 = vsel %vm247, %v219, 0
      %v252 = vsel %vm247, %v220, 0
      %v255 = vsel %vm247, %v221, 0
      %v258 = vsel %vm247, %v222, 0
      %vm260 = vcmask 1043456
      %v262 = vsel %vm260, %v217, 0
      %v265 = vsel %vm260, %v218, 0
      %267 = vmatpush.msra.mxu0 0.0
      %268 = vmatpush.msra.mxu0 0.0
      %269 = vmatpush.msra.mxu0 0.0
      %270 = vmatpush.msra.mxu0 0.0
      %271 = vmatpush.msra.mxu0 0.0
      %272 = vmatpush.msra.mxu0 0.0
      %273 = vmatpush.msra.mxu0 0.0
      %274 = vmatpush.msra.mxu0 0.0
      %275 = vmatpush.msra.mxu0 0.0
      %276 = vmatpush.msra.mxu0 0.0
      %277 = vmatpush.msra.mxu0 0.0
      %278 = vmatpush.msra.mxu0 %v262
      %279 = vmatpush.msra.mxu0 %v215
      %280 = vmatpush.msra.mxu0 %v213
      %281 = vmatpush.msra.mxu0 %v211
      %282 = vmatpush.msra.mxu0 %v209
      %283 = vmatmul.f32.gmra.mxu0 %v249
      %v284 = vpop.f32.mrf.mxu0
      %v285 = vadd.f32 %v230, %v284
      %286 = vmatmul.f32.gmra.mxu0 %v252
      %v287 = vpop.f32.mrf.mxu0
      %v288 = vadd.f32 %v235, %v287
      %289 = vmatmul.f32.gmra.mxu0 %v255
      %v290 = vpop.f32.mrf.mxu0
      %v291 = vadd.f32 %v240, %v290
      %292 = vmatmul.f32.gmra.mxu0 %v258
      %v293 = vpop.f32.mrf.mxu0
      %v294 = vadd.f32 %v245, %v293
      %295 = vdwg.mxu0
      %296 = vmatpush.msra.mxu0 0.0
      %297 = vmatpush.msra.mxu0 0.0
      %298 = vmatpush.msra.mxu0 0.0
      %299 = vmatpush.msra.mxu0 0.0
      %300 = vmatpush.msra.mxu0 0.0
      %301 = vmatpush.msra.mxu0 0.0
      %302 = vmatpush.msra.mxu0 0.0
      %303 = vmatpush.msra.mxu0 0.0
      %304 = vmatpush.msra.mxu0 0.0
      %305 = vmatpush.msra.mxu0 0.0
      %306 = vmatpush.msra.mxu0 0.0
      %307 = vmatpush.msra.mxu0 %v265
      %308 = vmatpush.msra.mxu0 %v216
      %309 = vmatpush.msra.mxu0 %v214
      %310 = vmatpush.msra.mxu0 %v212
      %311 = vmatpush.msra.mxu0 %v210
      %312 = vmatmul.f32.gmra.mxu0 %v249
      %v313 = vpop.f32.mrf.mxu0
      %v314 = vadd.f32 %v230, %v313
      %315 = vmatmul.f32.gmra.mxu0 %v252
      %v316 = vpop.f32.mrf.mxu0
      %v317 = vadd.f32 %v235, %v316
      %318 = vmatmul.f32.gmra.mxu0 %v255
      %v319 = vpop.f32.mrf.mxu0
      %v320 = vadd.f32 %v240, %v319
      %321 = vmatmul.f32.gmra.mxu0 %v258
      %v322 = vpop.f32.mrf.mxu0
      %v323 = vadd.f32 %v245, %v322
      %324 = vdwg.mxu0
      %v325 = vmul.f32 %v285, 0.01
      %v326 = vmul.f32 %v314, 0.01
      %v327 = vmul.f32 %v288, 0.01
      %v328 = vmul.f32 %v317, 0.01
      %v329 = vmul.f32 %v291, 0.01
      %v330 = vmul.f32 %v320, 0.01
      %v331 = vmul.f32 %v294, 0.01
      %v332 = vmul.f32 %v323, 0.01
      %v333 = vmax.f32 %v285, %v325
      %v334 = vmax.f32 %v314, %v326
      %v335 = vmax.f32 %v288, %v327
      %v336 = vmax.f32 %v317, %v328
      %v337 = vmax.f32 %v291, %v329
      %v338 = vmax.f32 %v320, %v330
      %v339 = vmax.f32 %v294, %v331
      %v340 = vmax.f32 %v323, %v332
      %v341 = vadd.f32 %v333, %v334
      %342 = vadd.xlane.f32.xlu0 %v341
      %v343 = vpop.xlane.xlu0 %342
      %v344 = vadd.f32 %v335, %v336
      %345 = vadd.xlane.f32.xlu0 %v344
      %v346 = vpop.xlane.xlu0 %345
      %v347 = vadd.f32 %v337, %v338
      %348 = vadd.xlane.f32.xlu0 %v347
      %v349 = vpop.xlane.xlu0 %348
      %v350 = vadd.f32 %v339, %v340
      %351 = vadd.xlane.f32.xlu0 %v350
      %v352 = vpop.xlane.xlu0 %351
      %v353 = vmul.f32 %v333, %v333
      %v354 = vmul.f32 %v334, %v334
      %v355 = vmul.f32 %v335, %v335
      %v356 = vmul.f32 %v336, %v336
      %v357 = vmul.f32 %v337, %v337
      %v358 = vmul.f32 %v338, %v338
      %v359 = vmul.f32 %v339, %v339
      %v360 = vmul.f32 %v340, %v340
      %v361 = vadd.f32 %v353, %v354
      %362 = vadd.xlane.f32.xlu0 %v361
      %v363 = vpop.xlane.xlu0 %362
      %v364 = vadd.f32 %v355, %v356
      %365 = vadd.xlane.f32.xlu0 %v364
      %v366 = vpop.xlane.xlu0 %365
      %v367 = vadd.f32 %v357, %v358
      %368 = vadd.xlane.f32.xlu0 %v367
      %v369 = vpop.xlane.xlu0 %368
      %v370 = vadd.f32 %v359, %v360
      %371 = vadd.xlane.f32.xlu0 %v370
      %v372 = vpop.xlane.xlu0 %371
      %v377 = vlaneseq
      %v378 = vand.u32 %v377, 127
      %v379 = vperm.slane %v343, %v378
      %v380 = vadd.s32 %v378, 4294967288
      %v381 = vperm.slane %v346, %v380
      %vm382 = vcmask 130112
      %v383 = vsel %vm382, %v381, %v379
      %v384 = vadd.s32 %v378, 4294967280
      %v385 = vperm.slane %v349, %v384
      %vm386 = vcmask 195712
      %v387 = vsel %vm386, %v385, %v383
      %v388 = vadd.s32 %v378, 4294967272
      %v389 = vperm.slane %v352, %v388
      %vm390 = vcmask 261312
      %v391 = vsel %vm390, %v389, %v387
      %v397 = vperm.slane %v363, %v378
      %v398 = vperm.slane %v366, %v380
      %v399 = vsel %vm382, %v398, %v397
      %v400 = vperm.slane %v369, %v384
      %v401 = vsel %vm386, %v400, %v399
      %v402 = vperm.slane %v372, %v388
      %v403 = vsel %vm390, %v402, %v401
      %vm405 = vcmask 1040384
      %v406 = vsel %vm405, %v391, %v403
      %vm407 = vcmask 254976
      %408 = vst.msk [vmem:[%s208] sm:$0x3] %vm407, %v406
      %409 = vst [vmem:[%s204] sm:$0xff] %v333
      %410 = vst [vmem:[%s204 + $0x8] sm:$0xff] %v334
      %411 = vst [vmem:[%s204 + $0x10] sm:$0xff] %v335
      %412 = vst [vmem:[%s204 + $0x18] sm:$0xff] %v336
      %413 = vst [vmem:[%s204 + $0x20] sm:$0xff] %v337
      %414 = vst [vmem:[%s204 + $0x28] sm:$0xff] %v338
      %415 = vst [vmem:[%s204 + $0x30] sm:$0xff] %v339
      %416 = vst [vmem:[%s204 + $0x38] sm:$0xff] %v340
      %p417 = scmp.lt.s32.totalorder %s16, 1
      %s418 = scalar_select %p417, %s16, 1
      %s419 = smul.addr %s418, 8
      %s420 = smul.addr %s419, 8
      %s421 = scalar_lea.vmem %s3, %s420
      %p422 = scmp.lt.s32.totalorder %s16, 1
      %s423 = scalar_select %p422, %s16, 1
      %s424 = smul.addr %s423, 2
      %s425 = scalar_lea.vmem %s4, %s424
      // Predicated region
      $region33: #{upsample_block_forward.1} parent=31 // pred_check
        %p426 = pneg %p102
      $region34: #{upsample_block_forward.1} parent=31 // pred_check_branch
        %428 = sbr.rel (%p426) target = $region36
      $region35: #{upsample_block_forward.1} parent=31 // pred_region
        _
      $region36: #{upsample_block_forward.1} parent=31 // pred_fallthru
        _
      // Predicated region
      $region37: #{upsample_block_forward.1} parent=31 // pred_check
        %p429 = pneg %p128
      $region38: #{upsample_block_forward.1} parent=31 // pred_check_branch
        %431 = sbr.rel (%p429) target = $region40
      $region39: #{upsample_block_forward.1} parent=31 // pred_region
        _
      $region40: #{upsample_block_forward.1} parent=31 // pred_fallthru
        _
    $region32: #{upsample_block_forward.1} parent=5 // pred_fallthru
      _
    %p432 = scmp.le.s32.totalorder 2, %s11
    // Predicated region
    $region41: #{upsample_block_forward.1} parent=5 // pred_check
      %p433 = pneg %p432
    $region42: #{upsample_block_forward.1} parent=5 // pred_check_branch
      %435 = sbr.rel (%p433) target = $region44
    $region43: #{upsample_block_forward.1} parent=5 // pred_region
      %s436 = ssub.s32 %s11, 2
      // Predicated region
      $region45: #{upsample_block_forward.1} parent=43 // pred_check
        %p437 = pneg %p108
      $region46: #{upsample_block_forward.1} parent=43 // pred_check_branch
        %439 = sbr.rel (%p437) target = $region48
      $region47: #{upsample_block_forward.1} parent=43 // pred_region
        %p440 = scmp.lt.s32.totalorder %s17, 1
        %s441 = scalar_select %p440, %s17, 1
        %s442 = smul.addr %s441, 8
        %s443 = smul.addr %s442, 8
        %s444 = scalar_lea.vmem %s3, %s443
      $region48: #{upsample_block_forward.1} parent=43 // pred_fallthru
        _
      // Predicated region
      $region49: #{upsample_block_forward.1} parent=43 // pred_check
        %p445 = pneg %p134
      $region50: #{upsample_block_forward.1} parent=43 // pred_check_branch
        %447 = sbr.rel (%p445) target = $region52
      $region51: #{upsample_block_forward.1} parent=43 // pred_region
        %p448 = scmp.lt.s32.totalorder %s17, 1
        %s449 = scalar_select %p448, %s17, 1
        %s450 = smul.addr %s449, 2
        %s451 = scalar_lea.vmem %s4, %s450
      $region52: #{upsample_block_forward.1} parent=43 // pred_fallthru
        _
    $region44: #{upsample_block_forward.1} parent=5 // pred_fallthru
      _
  $region6: #{upsample_block_forward.1} parent=0 // loop_footer
    %s15 = sadd.s32 1, %s11
  $region7: #{upsample_block_forward.1} parent=0 // loop_footer_branch
    %10 = sbr.rel target = $region3
  $region8: #{upsample_block_forward.1} parent=0 // loop_exit
    _

</llo_original>
